<compile_context>
chip_gen: v7x
topology: tpu7x:2x2x1
jax: 0.10.0
libtpu: 0.0.40
codegen_flags: <defaults>
</compile_context>

<pallas_src>
import functools

import jax
import jax.numpy as jnp
from jax.experimental import pallas as pl
from jax.experimental.pallas import tpu as pltpu

_LANE = 512             # preferred lane-dense width (multiple of 128)
_BLOCK_BYTES = 4 << 20  # ~4 MiB of input per block


def _dropout_rng_kernel(seed_ref, x_ref, o_ref, *, threshold: int, scale: float):
    # Hardware PRNG path (TPU only).  Fold the grid step into the seed so every
    # tile gets an independent stream regardless of which TC executes it.
    pltpu.prng_seed(seed_ref[0], pl.program_id(0))
    raw = pltpu.prng_random_bits(x_ref.shape)
    bits = raw if raw.dtype == jnp.uint32 else pltpu.bitcast(raw, jnp.uint32)
    # keep with probability 1 - p: raw 32-bit integer compare (no shift,
    # no int->float convert, no multiply).
    keep = bits >= jnp.uint32(threshold)
    x = x_ref[...]
    o_ref[...] = jnp.where(keep, x * jnp.asarray(scale, x.dtype), jnp.zeros_like(x))


def _dropout_bits_kernel(x_ref, r_ref, o_ref, *, threshold: int, scale: float):
    # Portable fallback: random uint32 bits supplied as an input.
    keep = r_ref[...] >= jnp.uint32(threshold)
    x = x_ref[...]
    o_ref[...] = jnp.where(keep, x * jnp.asarray(scale, x.dtype), jnp.zeros_like(x))


def _round_up(a: int, b: int) -> int:
    return pl.cdiv(a, b) * b


def pallas_dropout(x: jax.Array, seed: int, p: float = 0.5, training: bool = True):
    """Dropout forward.  Matches nn.Dropout(p) semantics (training mode)."""
    if (not training) or p == 0.0:
        return x
    if p >= 1.0:
        return jnp.zeros_like(x)

    orig_shape = x.shape
    total = int(x.size)
    if total == 0:
        return x

    # keep iff bits >= threshold  =>  P(keep) = 1 - p   (clamped 32-bit threshold)
    threshold = min(int(round(p * float(1 << 32))), (1 << 32) - 1)
    scale = 1.0 / (1.0 - p)
    dsize = jnp.dtype(x.dtype).itemsize
    sub = 8 * max(1, 4 // dsize)  # packed sublane multiple: 8 f32 / 16 bf16 / 32 int8

    # ---- zero-copy 2-D layout (reshape of a contiguous buffer is free) ----
    # Dropout is elementwise, so any layout is semantically equivalent to
    # nn.Dropout.  Prefer a lane-dense width; never pad, never slice.
    lane = None
    for cand in (_LANE, 256, 128):
        if total % cand == 0:
            lane = cand
            break
    if lane is None:
        # TODO(synk): ragged totals (trailing dim not a multiple of 128) fall back
        # to the native layout -> masked (non lane-dense) stores; rare for NN shapes.
        lane = orig_shape[-1] if (x.ndim >= 1 and orig_shape[-1] > 0) else total
    rows = total // lane
    x2 = x.reshape(rows, lane)

    # ---- row tile: ~4 MiB per block, packed-sublane multiple, >= ~4 steps ----
    if rows <= sub:
        tm = rows                                   # single full-extent block
    else:
        tm_budget = max(sub, (_BLOCK_BYTES // (lane * dsize)) // sub * sub)
        tm_split = _round_up(pl.cdiv(rows, 4), sub)  # keep >= ~4 grid steps
        tm = max(sub, min(tm_budget, tm_split))
    grid = (pl.cdiv(rows, tm),)                      # ragged last block is masked

    block_bytes = tm * lane * dsize
    # v7x has only 64 MiB VMEM per TC -> cap the scoped-VMEM request at 48 MiB.
    vmem_limit = int(min(48 << 20, max(16 << 20, 8 * block_bytes)))
    out_shape = jax.ShapeDtypeStruct((rows, lane), x.dtype)
    cost = pl.CostEstimate(flops=2 * total, transcendentals=0,
                           bytes_accessed=2 * total * dsize)

    if jax.default_backend() == "tpu":
        # In-kernel hardware PRNG: read x, write out -> 2N bytes of HBM traffic.
        # (input_output_aliases could alias x -> out if the caller donates x.)
        out2 = pl.pallas_call(
            functools.partial(_dropout_rng_kernel, threshold=threshold, scale=scale),
            out_shape=out_shape,
            grid_spec=pltpu.PrefetchScalarGridSpec(
                num_scalar_prefetch=1,
                grid=grid,
                in_specs=[pl.BlockSpec((tm, lane), lambda i, s: (i, 0))],
                out_specs=pl.BlockSpec((tm, lane), lambda i, s: (i, 0)),
            ),
            compiler_params=pltpu.CompilerParams(
                dimension_semantics=("parallel",),   # independent tiles -> both TCs
                vmem_limit_bytes=vmem_limit,
                has_side_effects=True,               # hardware PRNG state
            ),
            cost_estimate=cost,
        )(jnp.asarray([seed], dtype=jnp.int32), x2)
    else:
        # TODO(synk): pltpu.prng_seed/prng_random_bits have no lowering off-TPU;
        # fall back to jax.random-generated bits streamed in as a second input.
        bits = jax.random.bits(jax.random.PRNGKey(seed), (rows, lane), jnp.uint32)
        out2 = pl.pallas_call(
            functools.partial(_dropout_bits_kernel, threshold=threshold, scale=scale),
            out_shape=out_shape,
            grid=grid,
            in_specs=[pl.BlockSpec((tm, lane), lambda i: (i, 0)),
                      pl.BlockSpec((tm, lane), lambda i: (i, 0))],
            out_specs=pl.BlockSpec((tm, lane), lambda i: (i, 0)),
            compiler_params=pltpu.CompilerParams(
                dimension_semantics=("parallel",),
                vmem_limit_bytes=vmem_limit,
            ),
            cost_estimate=pl.CostEstimate(flops=2 * total, transcendentals=0,
                                          bytes_accessed=2 * total * dsize + total * 4),
        )(x2, bits)

    return out2.reshape(orig_shape)   # free reshape; no pad, no slice


if __name__ == "__main__":
    key = jax.random.PRNGKey(0)
    # Small transformer-ish activation: batch=2, seq=8, hidden=32
    x = jax.random.normal(key, (2, 8, 32), dtype=jnp.float32)

    p = 0.5
    out = jax.block_until_ready(pallas_dropout(x, seed=1234, p=p, training=True))

    # Dropout semantics: surviving elements equal x / (1 - p), dropped elements
    # are exactly 0, and the keep fraction is roughly 1 - p.
    scale = 1.0 / (1.0 - p)
    kept = out != 0.0
    assert out.shape == x.shape and out.dtype == x.dtype
    assert jnp.allclose(jnp.where(kept, out, 0.0),
                        jnp.where(kept, x * scale, 0.0), rtol=1e-6, atol=1e-6)
    keep_frac = float(jnp.mean(kept.astype(jnp.float32)))
    assert 0.2 < keep_frac < 0.8, f"keep fraction {keep_frac} implausible for p={p}"

    # Eval mode (training=False) is the identity, as in nn.Dropout.
    out_eval = jax.block_until_ready(pallas_dropout(x, seed=1234, p=p, training=False))
    assert jnp.array_equal(out_eval, x)

    print("KERNEL_OK")
</pallas_src>

<mosaic_0001>
module attributes {stable_mosaic.version = 11 : i64} {
  func.func @_dropout_bits_kernel(%arg0: i32, %arg1: memref<1x512xf32, #tpu.memory_space<vmem>>, %arg2: memref<1x512xi32, #tpu.memory_space<vmem>>, %arg3: memref<1x512xf32, #tpu.memory_space<vmem>>) attributes {dimension_semantics = [#tpu.dimension_semantics<parallel>], iteration_bounds = array<i64: 1>, scalar_prefetch = 0 : i64, scratch_operands = 0 : i64, tpu.core_type = #tpu.core_type<tc>, window_params = [{transform_indices = @transform_0, window_bounds = array<i64: 1, 512>}, {transform_indices = @transform_1, window_bounds = array<i64: 1, 512>}, {transform_indices = @transform_2, window_bounds = array<i64: 1, 512>}]} {
    %c0 = arith.constant 0 : index
    %c0_0 = arith.constant 0 : index
    %0 = vector.load %arg2[%c0, %c0_0] : memref<1x512xi32, #tpu.memory_space<vmem>>, vector<1x512xi32>
    %c-2147483648_i32 = arith.constant -2147483648 : i32
    %1 = vector.broadcast %c-2147483648_i32 : i32 to vector<1x512xi32>
    %2 = arith.cmpi uge, %0, %1 : vector<1x512xi32>
    %c0_1 = arith.constant 0 : index
    %c0_2 = arith.constant 0 : index
    %3 = vector.load %arg1[%c0_1, %c0_2] : memref<1x512xf32, #tpu.memory_space<vmem>>, vector<1x512xf32>
    %cst = arith.constant 2.000000e+00 : f32
    %4 = vector.broadcast %cst : f32 to vector<1x512xf32>
    %5 = arith.mulf %3, %4 : vector<1x512xf32>
    %cst_3 = arith.constant 0.000000e+00 : f32
    %6 = vector.broadcast %cst_3 : f32 to vector<1x512xf32>
    %7 = arith.select %2, %5, %6 : vector<1x512xi1>, vector<1x512xf32>
    %c0_4 = arith.constant 0 : index
    %c0_5 = arith.constant 0 : index
    %8 = vector.load %arg3[%c0_4, %c0_5] : memref<1x512xf32, #tpu.memory_space<vmem>>, vector<1x512xf32>
    tpu.vector_store %arg3[%c0_4, %c0_5], %7 {strides = array<i32>} : memref<1x512xf32, #tpu.memory_space<vmem>>, vector<1x512xf32>,
    return
  }
  func.func @transform_0(%arg0: i32) -> (i32, i32) {
    %c0_i32 = arith.constant 0 : i32
    %c0_i32_0 = arith.constant 0 : i32
    return %arg0, %c0_i32 : i32, i32
  }
  func.func @transform_1(%arg0: i32) -> (i32, i32) {
    %c0_i32 = arith.constant 0 : i32
    %c0_i32_0 = arith.constant 0 : i32
    return %arg0, %c0_i32 : i32, i32
  }
  func.func @transform_2(%arg0: i32) -> (i32, i32) {
    %c0_i32 = arith.constant 0 : i32
    %c0_i32_0 = arith.constant 0 : i32
    return %arg0, %c0_i32 : i32, i32
  }
}

</mosaic_0001>

<llo_original>
// kernel: tpu_custom_call.1
$region0: #{tpu_custom_call.1}
  #allocation0 [shape = 'u32[]', space=smem, size = 0x4, offset = 0x4, fixed_abs, tag = 'smem constant byte address 0x4 - core index']
  #allocation1 [shape = 'u32[144,128]{1,0:T(1,128)}', space=vmem, size = 0x12000, scoped, tag = 'internal scratch']
  %s0 = inlined_call_operand.hbm [shape: f32[1,512], index: 0, kind: input, shape index: {}]
  %s1 = inlined_call_operand.hbm [shape: u32[1,512], index: 1, kind: input, shape index: {}]
  %s2 = inlined_call_operand.hbm [shape: f32[1,512], index: 2, kind: output, shape index: {}]
  %s3 = sld [smem:[#allocation0]]
  $region26: #{tpu_custom_call.1} parent=0
    _
  %s5 = ssub.s32 1, %s3
  %s6 = scalar_select 0, %s5, %s3
  $region1: #{tpu_custom_call.1} parent=0
    #allocation2 [shape = 'u8[2048]{0}', space=vmem, size = 0x800, scoped, tag = 'input window, operand 0, single buffered']
    #allocation3 [shape = 's32[1]{0}', space=sflag, size = 0x4, scoped, tag = 'scoped memory for tpu_custom_call.1']
    #allocation4 [shape = 's32[1]{0}', space=sflag, size = 0x4, scoped, tag = 'scoped memory for tpu_custom_call.1']
    #allocation5 [shape = 'u8[2048]{0}', space=vmem, size = 0x800, scoped, tag = 'input window, operand 1, single buffered']
    #allocation6 [shape = 's32[1]{0}', space=sflag, size = 0x4, scoped, tag = 'scoped memory for tpu_custom_call.1']
    #allocation7 [shape = 'u8[2048]{0}', space=vmem, size = 0x800, scoped, tag = 'output window, operand 0, single buffered']
    %7 = vsyncpa [#allocation3], 0
    %8 = vsyncpa [#allocation6], 0
    %9 = vsyncpa [#allocation4], 0
    // Predicated region
    $region2: #{tpu_custom_call.1} parent=1 // pred_check
      _
    $region3: #{tpu_custom_call.1} parent=1 // pred_check_branch
      %11 = sbr.rel (0) target = $region5
    $region4: #{tpu_custom_call.1} parent=1 // pred_region
      %s13 = ssub.s32 64, 64
      %14 = vsyncadd [#allocation3], %s13
      %s16 = sshll.u32 [#allocation2], 4
      %s17 = int_to_ptr.vmem [resolvable:$true] %s16
      %19 = dma.hbm_to_vmem [thread:$0]  %s0, 64, %s17, [#allocation3]
    $region5: #{tpu_custom_call.1} parent=1 // pred_fallthru
      _
    // Predicated region
    $region6: #{tpu_custom_call.1} parent=1 // pred_check
      _
    $region7: #{tpu_custom_call.1} parent=1 // pred_check_branch
      %21 = sbr.rel (0) target = $region9
    $region8: #{tpu_custom_call.1} parent=1 // pred_region
      %s23 = ssub.s32 64, 64
      %24 = vsyncadd [#allocation6], %s23
      %s26 = sshll.u32 [#allocation5], 4
      %s27 = int_to_ptr.vmem [resolvable:$true] %s26
      %29 = dma.hbm_to_vmem [thread:$0]  %s1, 64, %s27, [#allocation6]
    $region9: #{tpu_custom_call.1} parent=1 // pred_fallthru
      _
    // Predicated region
    $region10: #{tpu_custom_call.1} parent=1 // pred_check
      _
    $region11: #{tpu_custom_call.1} parent=1 // pred_check_branch
      %31 = sbr.rel (0) target = $region13
    $region12: #{tpu_custom_call.1} parent=1 // pred_region
      %32 = dma.done [#allocation3], 64
    $region13: #{tpu_custom_call.1} parent=1 // pred_fallthru
      _
    // Predicated region
    $region14: #{tpu_custom_call.1} parent=1 // pred_check
      _
    $region15: #{tpu_custom_call.1} parent=1 // pred_check_branch
      %34 = sbr.rel (0) target = $region17
    $region16: #{tpu_custom_call.1} parent=1 // pred_region
      %35 = dma.done [#allocation6], 64
    $region17: #{tpu_custom_call.1} parent=1 // pred_fallthru
      _
    %v36 = vld [vmem:[#allocation5] sm:$0xf]
    %vm37 = vcmp.ge.u32.totalorder %v36, 2147483648
    %v38 = vld [vmem:[#allocation2] sm:$0xf]
    %v39 = vmul.f32 %v38, 2.0
    %v40 = vsel %vm37, %v39, 0.0
    %v41 = vlaneseq
    %vm42 = vcmp.ge.s32.totalorder %v41, 0
    %vm43 = vcmp.lt.s32.totalorder %v41, 512
    %vm44 = vmand %vm42, %vm43
    %45 = vst.msk [vmem:[#allocation7] sm:$0xf] %vm44, %v40
    // Predicated region
    $region18: #{tpu_custom_call.1} parent=1 // pred_check
      _
    $region19: #{tpu_custom_call.1} parent=1 // pred_check_branch
      %47 = sbr.rel (0) target = $region21
    $region20: #{tpu_custom_call.1} parent=1 // pred_region
      %s49 = ssub.s32 64, 64
      %50 = vsyncadd [#allocation4], %s49
      %s52 = sshll.u32 [#allocation7], 4
      %s53 = int_to_ptr.vmem [resolvable:$true] %s52
      %55 = dma.vmem_to_hbm [thread:$0]  %s53, 64, %s2, [#allocation4]
    $region21: #{tpu_custom_call.1} parent=1 // pred_fallthru
      _
    // Predicated region
    $region22: #{tpu_custom_call.1} parent=1 // pred_check
      _
    $region23: #{tpu_custom_call.1} parent=1 // pred_check_branch
      %57 = sbr.rel (0) target = $region25
    $region24: #{tpu_custom_call.1} parent=1 // pred_region
      %58 = dma.done [#allocation4], 64
    $region25: #{tpu_custom_call.1} parent=1 // pred_fallthru
      _
    %59 = vsyncpa [#allocation3], 1
    %60 = vsyncpa [#allocation6], 1
    %61 = vsyncpa [#allocation4], 1

</llo_original>
